<compile_context>
chip_gen: v7x
topology: tpu7x:2x2x1
jax: 0.10.0
libtpu: 0.0.40
codegen_flags: <defaults>
</compile_context>

<pallas_src>
import functools

import jax
import jax.numpy as jnp
from jax.experimental import pallas as pl
from jax.experimental.pallas import tpu as pltpu

_LANE_CANDIDATES = (4096, 2048, 1024, 512, 256, 128)  # lane-dense widths
_SUBLANE_QUANTUM = 32                                 # multiple of 8/16/32
_MIB = 1024 * 1024


def _squared_relu_jnp(x: jax.Array) -> jax.Array:
    """Plain-XLA fallback: one fused elementwise pass (no pad/slice traffic)."""
    r = jnp.maximum(x, jnp.zeros((), dtype=x.dtype))
    return r * r


def _squared_relu_kernel(x_ref, o_ref):
    x = x_ref[...]
    # dtype-matched zero: no weak-float promotion (works for f32/bf16/ints).
    r = jnp.maximum(x, jnp.zeros((), dtype=x.dtype))
    o_ref[...] = r * r


@functools.lru_cache(maxsize=1)
def _chip_profile():
    """Returns (block_bytes, vmem_limit_bytes_or_None, multi_tensorcore)."""
    kind = ""
    try:
        kind = jax.devices()[0].device_kind.lower()
    except Exception:
        pass

    if "v7" in kind:
        # 3.2 TB/s HBM, only 64 MiB VMEM/TC, 2 TCs/chip: big blocks, tight cap.
        block_bytes, vmem_limit, multi_tc = 8 * _MIB, 48 * _MIB, True
    elif "v6" in kind or "trillium" in kind:
        # 1.3-1.4 TB/s HBM, 128 MiB VMEM: 8 MiB blocks need a raised scope.
        block_bytes, vmem_limit, multi_tc = 8 * _MIB, 48 * _MIB, False
    elif "v5e" in kind or "v5 lite" in kind or "v5lite" in kind:
        # 0.82 TB/s HBM: 3 MiB blocks (12 MiB resident) fit the 16 MiB default
        # scoped-VMEM limit with no override; bigger buys almost nothing.
        block_bytes, vmem_limit, multi_tc = 3 * _MIB, None, False
    else:
        # Unknown generation: conservative, fits every default scoped limit.
        block_bytes, vmem_limit, multi_tc = 2 * _MIB, None, False

    # Safety clamp against physical VMEM (headroom for compiler scratch +
    # the 4x block double-buffer of input + output).
    try:
        cap = getattr(pltpu.get_tpu_info(), "vmem_capacity_bytes", None)
        if cap:
            budget = int(cap * 3 // 4)
            if vmem_limit is not None:
                vmem_limit = min(vmem_limit, budget)
            block_bytes = min(block_bytes, max(_MIB, budget // 6))
    except Exception:
        pass
    return block_bytes, vmem_limit, multi_tc


def _dim_semantics(grid_size: int, multi_tc: bool):
    # On multi-TensorCore chips (v7x) explicitly shard the row grid across the
    # cores; plain "parallel" barely changes codegen per measured data.
    if multi_tc and grid_size >= 2:
        core_parallel = getattr(pltpu, "CORE_PARALLEL", None)
        if core_parallel is not None:
            return (core_parallel,)
    return ("parallel",)


def squared_relu(x: jax.Array, *, block_rows: int | None = None) -> jax.Array:
    """Elementwise squared ReLU, y = relu(x)^2."""
    orig_shape = x.shape
    n = x.size
    if n == 0:
        return x

    # Largest lane-dense width (multiple of 128) that divides the size.
    width = next((c for c in _LANE_CANDIDATES if n % c == 0), 0)
    if width == 0:
        # Not 128-divisible: a single fused XLA elementwise pass beats
        # pad + Pallas + slice (which would ~3x the HBM traffic).
        return _squared_relu_jnp(x)

    x2d = x.reshape(-1, width)
    rows = x2d.shape[0]

    block_bytes, vmem_limit, multi_tc = _chip_profile()
    itemsize = jnp.dtype(x.dtype).itemsize

    if block_rows is None:
        row_tile = block_bytes // (width * itemsize)
        row_tile = max(_SUBLANE_QUANTUM,
                       (row_tile // _SUBLANE_QUANTUM) * _SUBLANE_QUANTUM)
    else:
        row_tile = block_rows
    if row_tile >= rows:
        row_tile = rows  # single block; full-extent dims are always legal

    grid = (pl.cdiv(rows, row_tile),)  # ragged tail -> masked edge block

    out2d = pl.pallas_call(
        _squared_relu_kernel,
        out_shape=jax.ShapeDtypeStruct((rows, width), x.dtype),
        grid_spec=pltpu.PrefetchScalarGridSpec(
            num_scalar_prefetch=0,
            grid=grid,
            in_specs=[pl.BlockSpec((row_tile, width), lambda i: (i, 0))],
            out_specs=pl.BlockSpec((row_tile, width), lambda i: (i, 0)),
        ),
        compiler_params=pltpu.CompilerParams(
            dimension_semantics=_dim_semantics(grid[0], multi_tc),
            vmem_limit_bytes=vmem_limit,
        ),
        cost_estimate=pl.CostEstimate(
            flops=2 * n,
            transcendentals=0,
            bytes_accessed=2 * n * itemsize,
        ),
    )(x2d)

    return out2d.reshape(orig_shape)


if __name__ == "__main__":
    key = jax.random.PRNGKey(0)

    def _ref(v):
        return jnp.square(jnp.maximum(v, jnp.zeros((), dtype=v.dtype)))

    # 1) GPT-decoder-style toy activation: batch=2, seq=8, hidden=32 (f32).
    #    512 elements -> lane-dense (1, 512) single block, no padding.
    x1 = jax.random.normal(key, (2, 8, 32), dtype=jnp.float32)
    y1 = squared_relu(x1)
    jax.block_until_ready(y1)
    assert y1.shape == x1.shape and y1.dtype == x1.dtype
    assert jnp.allclose(y1, _ref(x1), atol=1e-6, rtol=1e-6)

    # 2) Multi-block path with a ragged tail (grid > 1, masked edge block).
    x2 = jax.random.normal(key, (4, 33, 128), dtype=jnp.float32)
    y2 = squared_relu(x2, block_rows=32)
    jax.block_until_ready(y2)
    assert y2.shape == x2.shape and y2.dtype == x2.dtype
    assert jnp.allclose(y2, _ref(x2), atol=1e-6, rtol=1e-6)

    # 3) bf16 + size not a multiple of 128 (exercises the fused jnp fallback,
    #    replacing the old pad+slice path).
    x3 = jax.random.normal(key, (3, 5, 7), dtype=jnp.bfloat16)
    y3 = squared_relu(x3)
    jax.block_until_ready(y3)
    assert y3.shape == x3.shape and y3.dtype == jnp.bfloat16
    assert jnp.allclose(y3.astype(jnp.float32),
                        _ref(x3).astype(jnp.float32), atol=1e-2, rtol=1e-2)

    # 4) int32 input (exercises the dtype-matched zero in the Pallas kernel).
    x4 = jax.random.randint(key, (8, 128), -5, 6, dtype=jnp.int32)
    y4 = squared_relu(x4)
    jax.block_until_ready(y4)
    assert y4.shape == x4.shape and y4.dtype == jnp.int32
    assert jnp.array_equal(y4, _ref(x4))

    print("KERNEL_OK")
</pallas_src>

<mosaic_0001>
module attributes {stable_mosaic.version = 11 : i64} {
  func.func @_squared_relu_kernel(%arg0: i32, %arg1: memref<1x512xf32, #tpu.memory_space<vmem>>, %arg2: memref<1x512xf32, #tpu.memory_space<vmem>>) attributes {dimension_semantics = [#tpu.dimension_semantics<parallel>], iteration_bounds = array<i64: 1>, scalar_prefetch = 0 : i64, scratch_operands = 0 : i64, tpu.core_type = #tpu.core_type<tc>, window_params = [{transform_indices = @transform_0, window_bounds = array<i64: 1, 512>}, {transform_indices = @transform_1, window_bounds = array<i64: 1, 512>}]} {
    %c0 = arith.constant 0 : index
    %c0_0 = arith.constant 0 : index
    %0 = vector.load %arg1[%c0, %c0_0] : memref<1x512xf32, #tpu.memory_space<vmem>>, vector<1x512xf32>
    %cst = arith.constant 0.000000e+00 : f32
    %1 = vector.broadcast %cst : f32 to vector<1x512xf32>
    %2 = arith.maximumf %0, %1 : vector<1x512xf32>
    %3 = arith.mulf %2, %2 : vector<1x512xf32>
    %c0_1 = arith.constant 0 : index
    %c0_2 = arith.constant 0 : index
    %4 = vector.load %arg2[%c0_1, %c0_2] : memref<1x512xf32, #tpu.memory_space<vmem>>, vector<1x512xf32>
    tpu.vector_store %arg2[%c0_1, %c0_2], %3 {strides = array<i32>} : memref<1x512xf32, #tpu.memory_space<vmem>>, vector<1x512xf32>,
    return
  }
  func.func @transform_0(%arg0: i32) -> (i32, i32) {
    %c0_i32 = arith.constant 0 : i32
    %c0_i32_0 = arith.constant 0 : i32
    return %arg0, %c0_i32 : i32, i32
  }
  func.func @transform_1(%arg0: i32) -> (i32, i32) {
    %c0_i32 = arith.constant 0 : i32
    %c0_i32_0 = arith.constant 0 : i32
    return %arg0, %c0_i32 : i32, i32
  }
}

</mosaic_0001>

<llo_original>
// kernel: tpu_custom_call.1
$region0: #{tpu_custom_call.1}
  #allocation0 [shape = 'u32[]', space=smem, size = 0x4, offset = 0x4, fixed_abs, tag = 'smem constant byte address 0x4 - core index']
  #allocation1 [shape = 'u32[144,128]{1,0:T(1,128)}', space=vmem, size = 0x12000, scoped, tag = 'internal scratch']
  %s0 = inlined_call_operand.hbm [shape: f32[1,512], index: 0, kind: input, shape index: {}]
  %s1 = inlined_call_operand.hbm [shape: f32[1,512], index: 1, kind: output, shape index: {}]
  %s2 = sld [smem:[#allocation0]]
  $region18: #{tpu_custom_call.1} parent=0
    _
  %s4 = ssub.s32 1, %s2
  %s5 = scalar_select 0, %s4, %s2
  $region1: #{tpu_custom_call.1} parent=0
    #allocation2 [shape = 'u8[2048]{0}', space=vmem, size = 0x800, scoped, tag = 'input window, operand 0, single buffered']
    #allocation3 [shape = 's32[1]{0}', space=sflag, size = 0x4, scoped, tag = 'scoped memory for tpu_custom_call.1']
    #allocation4 [shape = 's32[1]{0}', space=sflag, size = 0x4, scoped, tag = 'scoped memory for tpu_custom_call.1']
    #allocation5 [shape = 'u8[2048]{0}', space=vmem, size = 0x800, scoped, tag = 'output window, operand 0, single buffered']
    %6 = vsyncpa [#allocation3], 0
    %7 = vsyncpa [#allocation4], 0
    // Predicated region
    $region2: #{tpu_custom_call.1} parent=1 // pred_check
      _
    $region3: #{tpu_custom_call.1} parent=1 // pred_check_branch
      %9 = sbr.rel (0) target = $region5
    $region4: #{tpu_custom_call.1} parent=1 // pred_region
      %s11 = ssub.s32 64, 64
      %12 = vsyncadd [#allocation3], %s11
      %s14 = sshll.u32 [#allocation2], 4
      %s15 = int_to_ptr.vmem [resolvable:$true] %s14
      %17 = dma.hbm_to_vmem [thread:$0]  %s0, 64, %s15, [#allocation3]
    $region5: #{tpu_custom_call.1} parent=1 // pred_fallthru
      _
    // Predicated region
    $region6: #{tpu_custom_call.1} parent=1 // pred_check
      _
    $region7: #{tpu_custom_call.1} parent=1 // pred_check_branch
      %19 = sbr.rel (0) target = $region9
    $region8: #{tpu_custom_call.1} parent=1 // pred_region
      %20 = dma.done [#allocation3], 64
    $region9: #{tpu_custom_call.1} parent=1 // pred_fallthru
      _
    %v21 = vld [vmem:[#allocation2] sm:$0xf]
    %v22 = vmax.f32 %v21, 0.0
    %v23 = vmul.f32 %v22, %v22
    %v24 = vlaneseq
    %vm25 = vcmp.ge.s32.totalorder %v24, 0
    %vm26 = vcmp.lt.s32.totalorder %v24, 512
    %vm27 = vmand %vm25, %vm26
    %28 = vst.msk [vmem:[#allocation5] sm:$0xf] %vm27, %v23
    // Predicated region
    $region10: #{tpu_custom_call.1} parent=1 // pred_check
      _
    $region11: #{tpu_custom_call.1} parent=1 // pred_check_branch
      %30 = sbr.rel (0) target = $region13
    $region12: #{tpu_custom_call.1} parent=1 // pred_region
      %s32 = ssub.s32 64, 64
      %33 = vsyncadd [#allocation4], %s32
      %s35 = sshll.u32 [#allocation5], 4
      %s36 = int_to_ptr.vmem [resolvable:$true] %s35
      %38 = dma.vmem_to_hbm [thread:$0]  %s36, 64, %s1, [#allocation4]
    $region13: #{tpu_custom_call.1} parent=1 // pred_fallthru
      _
    // Predicated region
    $region14: #{tpu_custom_call.1} parent=1 // pred_check
      _
    $region15: #{tpu_custom_call.1} parent=1 // pred_check_branch
      %40 = sbr.rel (0) target = $region17
    $region16: #{tpu_custom_call.1} parent=1 // pred_region
      %41 = dma.done [#allocation4], 64
    $region17: #{tpu_custom_call.1} parent=1 // pred_fallthru
      _
    %42 = vsyncpa [#allocation3], 1
    %43 = vsyncpa [#allocation4], 1

</llo_original>
